<compile_context>
chip_gen: v5e
topology: v5e:2x2
jax: 0.10.0
libtpu: 0.0.40
codegen_flags: <defaults>
</compile_context>

<pallas_src>
import functools

import jax
import jax.numpy as jnp
from jax.experimental import pallas as pl
from jax.experimental.pallas import tpu as pltpu


def _convblock_kernel(x_ref, w_ref, b_ref, mask_ref, out_ref, *, dot_dtype):
    # x_ref    : (Cin, T)          T = batch_tile * L, channels on sublanes,
    #                              batch*length on the 128-lane axis
    # w_ref    : (K+1, Cout, Cin)  per-tap conv weights; tap K = residual 1x1
    # b_ref    : (Cout, 1)         folded bias  b_conv + b_res
    # mask_ref : (K, 1, T)         0/1 'same'-padding boundary masks per tap
    # out_ref  : (Cout, T)
    K = w_ref.shape[0] - 1
    pad = (K - 1) // 2
    T = x_ref.shape[1]

    x = x_ref[...]                       # f32
    xr = jnp.maximum(x, 0.0)             # ReLU feeds the K-tap conv

    x_d = x.astype(dot_dtype)
    xr_d = xr.astype(dot_dtype)

    # Residual 1x1 conv on the raw (pre-ReLU) input.
    acc = jnp.dot(w_ref[K], x_d, preferred_element_type=jnp.float32)

    # K conv taps: lane roll (XLU) + boundary mask multiply (VPU) + small MXU
    # dot, all accumulated in f32.  No shift matmuls, no concat/retiling.
    for k in range(K):
        off = k - pad                                      # static per tap
        if off == 0:
            tap = xr_d
        else:
            # rolled[:, j] = xr[:, j + off]  (jnp.roll semantics)
            rolled = pltpu.roll(xr_d, shift=(-off) % T, axis=1)
            tap = rolled * mask_ref[k]                     # (Cin,T) * (1,T)
        acc = acc + jnp.dot(w_ref[k], tap, preferred_element_type=jnp.float32)

    out_ref[...] = (acc + b_ref[...]).astype(out_ref.dtype)


def conv_block(x_ncl, w_conv, b_conv, w_res, b_res, *,
               batch_tile=None, dot_dtype=None,
               vmem_budget_bytes=12 * 1024 * 1024):
    """ConvBlock forward.  x_ncl: (N, Cin, L) float32.  Returns (N, Cout, L)."""
    N, Cin, L = x_ncl.shape
    Cout, Cin2, K = w_conv.shape
    assert Cin2 == Cin
    assert K % 2 == 1, "kernel assumes odd K (PyTorch 'same' padding (K-1)//2)"
    pad = (K - 1) // 2

    compute_dtype = jnp.float32
    if dot_dtype is None:
        # Pass jnp.bfloat16 on v6e/v7x once a looser tolerance is acceptable;
        # accumulation stays f32 via preferred_element_type either way.
        dot_dtype = compute_dtype

    # ---- weight / bias packing (tiny, done once on the wrapper side) ----
    w_taps = jnp.transpose(w_conv, (2, 0, 1))                     # (K, Cout, Cin)
    w_all = jnp.concatenate(
        [w_taps, jnp.transpose(w_res, (2, 0, 1))], axis=0         # (K+1, Cout, Cin)
    ).astype(dot_dtype)
    b_total = (b_conv + b_res).reshape(Cout, 1).astype(jnp.float32)

    # ---- lane-dense activation layout: (Cin, N*L) ----
    T_total = N * L
    x_cl = jnp.transpose(x_ncl, (1, 0, 2)).reshape(Cin, T_total).astype(compute_dtype)

    # ---- per-tap boundary masks, built ONCE (no per-step iota/mod in-kernel) ----
    l_pos = jnp.arange(T_total, dtype=jnp.int32) % L              # pos within segment
    masks = jnp.stack(
        [((l_pos + (k - pad) >= 0) & (l_pos + (k - pad) < L)) for k in range(K)],
        axis=0,
    ).astype(dot_dtype).reshape(K, 1, T_total)

    # ---- batch tiling along the lane axis (whole batch elements per tile) ----
    itemsize = 4
    def _block_bytes(d):          # double-buffered in/out activation blocks
        return 2 * d * L * (Cin + Cout) * itemsize

    if batch_tile is None:
        batch_tile = N            # fallback: single full block (block == array dims)
        for d in sorted((d for d in range(1, N) if N % d == 0), reverse=True):
            if ((d * L) % 128 == 0 and N // d >= 2
                    and _block_bytes(d) <= vmem_budget_bytes):
                batch_tile = d
                break
    assert N % batch_tile == 0
    T_blk = batch_tile * L
    assert T_blk == T_total or T_blk % 128 == 0, "lane tile must be 128-aligned"
    grid = (N // batch_tile,)

    kernel = functools.partial(_convblock_kernel, dot_dtype=dot_dtype)

    out_cl = pl.pallas_call(
        kernel,
        out_shape=jax.ShapeDtypeStruct((Cout, T_total), x_ncl.dtype),
        grid=grid,
        in_specs=[
            pl.BlockSpec((Cin, T_blk), lambda g: (0, g)),
            pl.BlockSpec((K + 1, Cout, Cin), lambda g: (0, 0, 0)),
            pl.BlockSpec((Cout, 1), lambda g: (0, 0)),
            pl.BlockSpec((K, 1, T_blk), lambda g: (0, 0, g)),
        ],
        out_specs=pl.BlockSpec((Cout, T_blk), lambda g: (0, g)),
        compiler_params=pltpu.CompilerParams(
            dimension_semantics=("parallel",),
            vmem_limit_bytes=32 * 1024 * 1024,
        ),
    )(x_cl, w_all, b_total, masks)

    # One wrapper-side un-flatten back to the native (N, Cout, L) layout.
    return jnp.transpose(out_cl.reshape(Cout, N, L), (1, 0, 2))


def reference(x, w_conv, b_conv, w_res, b_res):
    K = w_conv.shape[2]
    pad = (K - 1) // 2
    dn = ('NCH', 'OIH', 'NCH')
    h = jax.lax.conv_general_dilated(jnp.maximum(x, 0.0), w_conv, (1,),
                                     [(pad, pad)], dimension_numbers=dn)
    h = h + b_conv[None, :, None]
    r = jax.lax.conv_general_dilated(x, w_res, (1,), [(0, 0)],
                                     dimension_numbers=dn)
    r = r + b_res[None, :, None]
    return h + r


if __name__ == "__main__":
    # ConvBlock(in_channels=4, out_channels=8, kernel=3, stride=1,
    #           affine=False, residual=True)
    N, Cin, Cout, K, L = 2, 4, 8, 3, 16

    key = jax.random.PRNGKey(0)
    k1, k2, k3, k4, k5 = jax.random.split(key, 5)

    x = jax.random.normal(k1, (N, Cin, L), dtype=jnp.float32)
    w_conv = jax.random.normal(k2, (Cout, Cin, K), dtype=jnp.float32) * 0.1
    b_conv = jax.random.normal(k3, (Cout,), dtype=jnp.float32) * 0.1
    w_res = jax.random.normal(k4, (Cout, Cin, 1), dtype=jnp.float32) * 0.1
    b_res = jax.random.normal(k5, (Cout,), dtype=jnp.float32) * 0.1

    out = conv_block(x, w_conv, b_conv, w_res, b_res)
    out = jax.block_until_ready(out)

    ref = reference(x, w_conv, b_conv, w_res, b_res)
    assert out.shape == (N, Cout, L)
    assert jnp.allclose(out, ref, atol=1e-4, rtol=1e-4), "mismatch vs reference"

    print("KERNEL_OK")
</pallas_src>

<mosaic_0001>
module attributes {stable_mosaic.version = 11 : i64} {
  func.func @_convblock_kernel(%arg0: i32, %arg1: memref<4x32xf32, #tpu.memory_space<vmem>>, %arg2: memref<4x8x4xf32, #tpu.memory_space<vmem>>, %arg3: memref<8x1xf32, #tpu.memory_space<vmem>>, %arg4: memref<3x1x32xf32, #tpu.memory_space<vmem>>, %arg5: memref<8x32xf32, #tpu.memory_space<vmem>>) attributes {dimension_semantics = [#tpu.dimension_semantics<parallel>], iteration_bounds = array<i64: 1>, scalar_prefetch = 0 : i64, scratch_operands = 0 : i64, tpu.core_type = #tpu.core_type<tc>, window_params = [{transform_indices = @transform_0, window_bounds = array<i64: 4, 32>}, {pipeline_mode = #tpu.pipeline_mode<synchronous>, transform_indices = @transform_1, window_bounds = array<i64: 4, 8, 4>}, {pipeline_mode = #tpu.pipeline_mode<synchronous>, transform_indices = @transform_2, window_bounds = array<i64: 8, 1>}, {transform_indices = @transform_3, window_bounds = array<i64: 3, 1, 32>}, {transform_indices = @transform_4, window_bounds = array<i64: 8, 32>}]} {
    %c0 = arith.constant 0 : index
    %c0_0 = arith.constant 0 : index
    %0 = vector.load %arg1[%c0, %c0_0] : memref<4x32xf32, #tpu.memory_space<vmem>>, vector<4x32xf32>
    %cst = arith.constant 0.000000e+00 : f32
    %1 = vector.broadcast %cst : f32 to vector<4x32xf32>
    %2 = arith.maximumf %0, %1 : vector<4x32xf32>
    %c3 = arith.constant 3 : index
    %c0_1 = arith.constant 0 : index
    %c0_2 = arith.constant 0 : index
    %3 = vector.load %arg2[%c3, %c0_1, %c0_2] : memref<4x8x4xf32, #tpu.memory_space<vmem>>, vector<1x8x4xf32>
    %4 = vector.shape_cast %3 : vector<1x8x4xf32> to vector<8x4xf32>
    %cst_3 = arith.constant dense<0.000000e+00> : vector<8x32xf32>
    %5 = tpu.matmul %4, %0, %cst_3 {dimension_numbers = #tpu.dot_dimension_numbers<[1], [0], [0], [1], [0, 0, 1, 1], [], []>} : vector<8x4xf32>, vector<4x32xf32>, vector<8x32xf32> -> vector<8x32xf32>
    %c1_i32 = arith.constant 1 : i32
    %6 = tpu.dynamic_rotate %2 by %c1_i32 dim 1 : vector<4x32xf32>, i32 -> vector<4x32xf32>
    %c0_4 = arith.constant 0 : index
    %c0_5 = arith.constant 0 : index
    %c0_6 = arith.constant 0 : index
    %7 = vector.load %arg4[%c0_4, %c0_5, %c0_6] : memref<3x1x32xf32, #tpu.memory_space<vmem>>, vector<1x1x32xf32>
    %8 = vector.shape_cast %7 : vector<1x1x32xf32> to vector<1x32xf32>
    %9 = vector.broadcast %8 : vector<1x32xf32> to vector<4x32xf32>
    %10 = arith.mulf %6, %9 : vector<4x32xf32>
    %c0_7 = arith.constant 0 : index
    %c0_8 = arith.constant 0 : index
    %c0_9 = arith.constant 0 : index
    %11 = vector.load %arg2[%c0_7, %c0_8, %c0_9] : memref<4x8x4xf32, #tpu.memory_space<vmem>>, vector<1x8x4xf32>
    %12 = vector.shape_cast %11 : vector<1x8x4xf32> to vector<8x4xf32>
    %cst_10 = arith.constant dense<0.000000e+00> : vector<8x32xf32>
    %13 = tpu.matmul %12, %10, %cst_10 {dimension_numbers = #tpu.dot_dimension_numbers<[1], [0], [0], [1], [0, 0, 1, 1], [], []>} : vector<8x4xf32>, vector<4x32xf32>, vector<8x32xf32> -> vector<8x32xf32>
    %14 = arith.addf %5, %13 : vector<8x32xf32>
    %c1 = arith.constant 1 : index
    %c0_11 = arith.constant 0 : index
    %c0_12 = arith.constant 0 : index
    %15 = vector.load %arg2[%c1, %c0_11, %c0_12] : memref<4x8x4xf32, #tpu.memory_space<vmem>>, vector<1x8x4xf32>
    %16 = vector.shape_cast %15 : vector<1x8x4xf32> to vector<8x4xf32>
    %cst_13 = arith.constant dense<0.000000e+00> : vector<8x32xf32>
    %17 = tpu.matmul %16, %2, %cst_13 {dimension_numbers = #tpu.dot_dimension_numbers<[1], [0], [0], [1], [0, 0, 1, 1], [], []>} : vector<8x4xf32>, vector<4x32xf32>, vector<8x32xf32> -> vector<8x32xf32>
    %18 = arith.addf %14, %17 : vector<8x32xf32>
    %c31_i32 = arith.constant 31 : i32
    %19 = tpu.dynamic_rotate %2 by %c31_i32 dim 1 : vector<4x32xf32>, i32 -> vector<4x32xf32>
    %c2 = arith.constant 2 : index
    %c0_14 = arith.constant 0 : index
    %c0_15 = arith.constant 0 : index
    %20 = vector.load %arg4[%c2, %c0_14, %c0_15] : memref<3x1x32xf32, #tpu.memory_space<vmem>>, vector<1x1x32xf32>
    %21 = vector.shape_cast %20 : vector<1x1x32xf32> to vector<1x32xf32>
    %22 = vector.broadcast %21 : vector<1x32xf32> to vector<4x32xf32>
    %23 = arith.mulf %19, %22 : vector<4x32xf32>
    %c2_16 = arith.constant 2 : index
    %c0_17 = arith.constant 0 : index
    %c0_18 = arith.constant 0 : index
    %24 = vector.load %arg2[%c2_16, %c0_17, %c0_18] : memref<4x8x4xf32, #tpu.memory_space<vmem>>, vector<1x8x4xf32>
    %25 = vector.shape_cast %24 : vector<1x8x4xf32> to vector<8x4xf32>
    %cst_19 = arith.constant dense<0.000000e+00> : vector<8x32xf32>
    %26 = tpu.matmul %25, %23, %cst_19 {dimension_numbers = #tpu.dot_dimension_numbers<[1], [0], [0], [1], [0, 0, 1, 1], [], []>} : vector<8x4xf32>, vector<4x32xf32>, vector<8x32xf32> -> vector<8x32xf32>
    %27 = arith.addf %18, %26 : vector<8x32xf32>
    %c0_20 = arith.constant 0 : index
    %c0_21 = arith.constant 0 : index
    %28 = vector.load %arg3[%c0_20, %c0_21] : memref<8x1xf32, #tpu.memory_space<vmem>>, vector<8x1xf32>
    %29 = vector.broadcast %28 : vector<8x1xf32> to vector<8x32xf32>
    %30 = arith.addf %27, %29 : vector<8x32xf32>
    %c0_22 = arith.constant 0 : index
    %c0_23 = arith.constant 0 : index
    %31 = vector.load %arg5[%c0_22, %c0_23] : memref<8x32xf32, #tpu.memory_space<vmem>>, vector<8x32xf32>
    tpu.vector_store %arg5[%c0_22, %c0_23], %30 {strides = array<i32>} : memref<8x32xf32, #tpu.memory_space<vmem>>, vector<8x32xf32>,
    return
  }
  func.func @transform_0(%arg0: i32) -> (i32, i32) {
    %c0_i32 = arith.constant 0 : i32
    %c0_i32_0 = arith.constant 0 : i32
    return %c0_i32, %arg0 : i32, i32
  }
  func.func @transform_1(%arg0: i32) -> (i32, i32, i32) {
    %c0_i32 = arith.constant 0 : i32
    %c0_i32_0 = arith.constant 0 : i32
    %c0_i32_1 = arith.constant 0 : i32
    %c0_i32_2 = arith.constant 0 : i32
    return %c0_i32, %c0_i32_0, %c0_i32_1 : i32, i32, i32
  }
  func.func @transform_2(%arg0: i32) -> (i32, i32) {
    %c0_i32 = arith.constant 0 : i32
    %c0_i32_0 = arith.constant 0 : i32
    %c0_i32_1 = arith.constant 0 : i32
    return %c0_i32, %c0_i32_0 : i32, i32
  }
  func.func @transform_3(%arg0: i32) -> (i32, i32, i32) {
    %c0_i32 = arith.constant 0 : i32
    %c0_i32_0 = arith.constant 0 : i32
    %c0_i32_1 = arith.constant 0 : i32
    return %c0_i32, %c0_i32_0, %arg0 : i32, i32, i32
  }
  func.func @transform_4(%arg0: i32) -> (i32, i32) {
    %c0_i32 = arith.constant 0 : i32
    %c0_i32_0 = arith.constant 0 : i32
    return %c0_i32, %arg0 : i32, i32
  }
}

</mosaic_0001>

<llo_original>
// kernel: tpu_custom_call.1
$region0: #{tpu_custom_call.1}
  #allocation0 [shape = 'u32[]', space=smem, size = 0x4, offset = 0x4, fixed_abs, tag = 'smem constant byte address 0x4 - core index']
  #allocation1 [shape = 'u32[72,128]{1,0:T(1,128)}', space=vmem, size = 0x9000, scoped, tag = 'internal scratch']
  %s0 = inlined_call_operand.vmem [shape: f32[4,32], index: 0, kind: input, shape index: {}]
  %s1 = inlined_call_operand.vmem [shape: f32[4,8,4], index: 1, kind: input, shape index: {}]
  %s2 = inlined_call_operand.vmem [shape: f32[8,1], index: 2, kind: input, shape index: {}]
  %s3 = inlined_call_operand.vmem [shape: f32[3,1,32], index: 3, kind: input, shape index: {}]
  %s4 = inlined_call_operand.hbm [shape: f32[8,32], index: 4, kind: output, shape index: {}]
  %s5 = sld [smem:[#allocation0]]
  $region26: #{tpu_custom_call.1} parent=0
    _
  %s7 = ssub.s32 1, %s5
  %s8 = scalar_select 0, %s7, %s5
  $region1: #{tpu_custom_call.1} parent=0
    #allocation2 [shape = 'u8[4096]{0}', space=vmem, size = 0x1000, scoped, tag = 'output window, operand 0, single buffered']
    #allocation3 [shape = 's32[1]{0}', space=sflag, size = 0x4, scoped, tag = 'scoped memory for tpu_custom_call.1']
    %9 = vsyncpa [#allocation3], 0
    // Predicated region
    $region2: #{tpu_custom_call.1} parent=1 // pred_check
      _
    $region3: #{tpu_custom_call.1} parent=1 // pred_check_branch
      %11 = sbr.rel (0) target = $region5
    $region4: #{tpu_custom_call.1} parent=1 // pred_region
      _
    $region5: #{tpu_custom_call.1} parent=1 // pred_fallthru
      _
    // Predicated region
    $region6: #{tpu_custom_call.1} parent=1 // pred_check
      _
    $region7: #{tpu_custom_call.1} parent=1 // pred_check_branch
      %13 = sbr.rel (0) target = $region9
    $region8: #{tpu_custom_call.1} parent=1 // pred_region
      _
    $region9: #{tpu_custom_call.1} parent=1 // pred_fallthru
      _
    // Predicated region
    $region10: #{tpu_custom_call.1} parent=1 // pred_check
      _
    $region11: #{tpu_custom_call.1} parent=1 // pred_check_branch
      %15 = sbr.rel (0) target = $region13
    $region12: #{tpu_custom_call.1} parent=1 // pred_region
      _
    $region13: #{tpu_custom_call.1} parent=1 // pred_fallthru
      _
    // Predicated region
    $region14: #{tpu_custom_call.1} parent=1 // pred_check
      _
    $region15: #{tpu_custom_call.1} parent=1 // pred_check_branch
      %17 = sbr.rel (0) target = $region17
    $region16: #{tpu_custom_call.1} parent=1 // pred_region
      _
    $region17: #{tpu_custom_call.1} parent=1 // pred_fallthru
      _
    %v18 = vld [vmem:[%s0] sm:$0xf]
    %v19 = vmax.f32 %v18, 0.0
    %s20 = scalar_lea.vmem %s1, 24
    %v21 = vld [vmem:[%s20] sm:$0xff]
    %vm22 = vcmask 1047808
    %23 = vrot.lane.b32.xlu0 %v19, 32
    %v24 = vpop.permute.xlu0 %23
    %v25 = vsel %vm22, %v24, %v19
    %26 = vrot.lane.b32.xlu0 %v25, 32
    %v27 = vpop.permute.xlu0 %26
    %v28 = vsel %vm22, %v27, %v19
    %v29 = vld [vmem:[%s3] sm:$0x1]
    %v31 = vperm.slane %v29, 0
    %32 = vrot.lane.b32.xlu0 %v31, 31
    %v33 = vpop.permute.xlu0 %32
    %v35 = vmul.f32 %v28, %v33
    %v36 = vld [vmem:[%s1] sm:$0xff]
    %38 = vrot.lane.b32.xlu0 %v35, 97
    %v39 = vpop.permute.xlu0 %38
    %vm40 = vcmask 31744
    %v42 = vsel %vm40, %v36, 0
    %vm44 = vcmask 1043456
    %v45 = vsel %vm44, %v39, 0
    %47 = vmatpush.msra.mxu0 0.0
    %48 = vmatpush.msra.mxu0 0.0
    %49 = vmatpush.msra.mxu0 0.0
    %50 = vmatpush.msra.mxu0 0.0
    %51 = vmatpush.msra.mxu0 0.0
    %52 = vmatpush.msra.mxu0 0.0
    %53 = vmatpush.msra.mxu0 0.0
    %54 = vmatpush.msra.mxu0 0.0
    %55 = vmatpush.msra.mxu0 0.0
    %56 = vmatpush.msra.mxu0 0.0
    %57 = vmatpush.msra.mxu0 0.0
    %58 = vmatpush.msra.mxu0 0.0
    %59 = vmatpush.msra.mxu0 0.0
    %60 = vmatpush.msra.mxu0 0.0
    %61 = vmatpush.msra.mxu0 0.0
    %62 = vmatpush.msra.mxu0 %v45
    %63 = vmatmul.f32.gmra.mxu0 %v42
    %v64 = vpop.f32.mrf.mxu0
    %v65 = vadd.f32 0.0, %v64
    %66 = vdwg.mxu0
    %v68 = vsel %vm40, %v21, 0
    %v71 = vsel %vm44, %v18, 0
    %73 = vmatpush.msra.mxu0 0.0
    %74 = vmatpush.msra.mxu0 0.0
    %75 = vmatpush.msra.mxu0 0.0
    %76 = vmatpush.msra.mxu0 0.0
    %77 = vmatpush.msra.mxu0 0.0
    %78 = vmatpush.msra.mxu0 0.0
    %79 = vmatpush.msra.mxu0 0.0
    %80 = vmatpush.msra.mxu0 0.0
    %81 = vmatpush.msra.mxu0 0.0
    %82 = vmatpush.msra.mxu0 0.0
    %83 = vmatpush.msra.mxu0 0.0
    %84 = vmatpush.msra.mxu0 0.0
    %85 = vmatpush.msra.mxu0 0.0
    %86 = vmatpush.msra.mxu0 0.0
    %87 = vmatpush.msra.mxu0 0.0
    %88 = vmatpush.msra.mxu0 %v71
    %89 = vmatmul.f32.gmra.mxu0 %v68
    %v90 = vpop.f32.mrf.mxu0
    %v91 = vadd.f32 %v65, %v90
    %92 = vdwg.mxu0
    %s93 = scalar_lea.vmem %s1, 8
    %v94 = vld [vmem:[%s93] sm:$0xff]
    %v96 = vsel %vm40, %v94, 0
    %v99 = vsel %vm44, %v19, 0
    %101 = vmatpush.msra.mxu0 0.0
    %102 = vmatpush.msra.mxu0 0.0
    %103 = vmatpush.msra.mxu0 0.0
    %104 = vmatpush.msra.mxu0 0.0
    %105 = vmatpush.msra.mxu0 0.0
    %106 = vmatpush.msra.mxu0 0.0
    %107 = vmatpush.msra.mxu0 0.0
    %108 = vmatpush.msra.mxu0 0.0
    %109 = vmatpush.msra.mxu0 0.0
    %110 = vmatpush.msra.mxu0 0.0
    %111 = vmatpush.msra.mxu0 0.0
    %112 = vmatpush.msra.mxu0 0.0
    %113 = vmatpush.msra.mxu0 0.0
    %114 = vmatpush.msra.mxu0 0.0
    %115 = vmatpush.msra.mxu0 0.0
    %116 = vmatpush.msra.mxu0 %v99
    %117 = vmatmul.f32.gmra.mxu0 %v96
    %v118 = vpop.f32.mrf.mxu0
    %v119 = vadd.f32 0.0, %v118
    %120 = vdwg.mxu0
    %v121 = vadd.f32 %v91, %v119
    %s122 = scalar_lea.vmem %s3, 2
    %v123 = vld [vmem:[%s122] sm:$0x1]
    %v125 = vperm.slane %v123, 0
    %126 = vrot.lane.b32.xlu0 %v125, 1
    %v127 = vpop.permute.xlu0 %126
    %v129 = vmul.f32 %v28, %v127
    %s130 = scalar_lea.vmem %s1, 16
    %v131 = vld [vmem:[%s130] sm:$0xff]
    %133 = vrot.lane.b32.xlu0 %v129, 127
    %v134 = vpop.permute.xlu0 %133
    %v136 = vsel %vm40, %v131, 0
    %v138 = vsel %vm44, %v134, 0
    %140 = vmatpush.msra.mxu0 0.0
    %141 = vmatpush.msra.mxu0 0.0
    %142 = vmatpush.msra.mxu0 0.0
    %143 = vmatpush.msra.mxu0 0.0
    %144 = vmatpush.msra.mxu0 0.0
    %145 = vmatpush.msra.mxu0 0.0
    %146 = vmatpush.msra.mxu0 0.0
    %147 = vmatpush.msra.mxu0 0.0
    %148 = vmatpush.msra.mxu0 0.0
    %149 = vmatpush.msra.mxu0 0.0
    %150 = vmatpush.msra.mxu0 0.0
    %151 = vmatpush.msra.mxu0 0.0
    %152 = vmatpush.msra.mxu0 0.0
    %153 = vmatpush.msra.mxu0 0.0
    %154 = vmatpush.msra.mxu0 0.0
    %155 = vmatpush.msra.mxu0 %v138
    %156 = vmatmul.f32.gmra.mxu0 %v136
    %v157 = vpop.f32.mrf.mxu0
    %v158 = vadd.f32 0.0, %v157
    %159 = vdwg.mxu0
    %v160 = vadd.f32 %v121, %v158
    %v161 = vld [vmem:[%s2] sm:$0xff]
    %163 = vset.pattern.permute.xlu0 0
    %164 = vperm.xlu0 %163, %v161
    %v165 = vpop.permute.xlu0 %164
    %v167 = vadd.f32 %v160, %v165
    %vm168 = vcmask 261120
    %169 = vst.msk [vmem:[#allocation2] sm:$0xff] %vm168, %v167
    // Predicated region
    $region18: #{tpu_custom_call.1} parent=1 // pred_check
      _
    $region19: #{tpu_custom_call.1} parent=1 // pred_check_branch
      %171 = sbr.rel (0) target = $region21
    $region20: #{tpu_custom_call.1} parent=1 // pred_region
      %173 = vsyncadd [#allocation3], 0
      %s175 = sshll.u32 [#allocation2], 4
      %s176 = int_to_ptr.vmem [resolvable:$true] %s175
      %s177 = sshll.u32 %s4, 4
      %s178 = int_to_ptr.hbm [resolvable:$true] %s177
      %180 = dma.vmem_to_hbm [thread:$0]  %s176, 128, %s178, [#allocation3]
    $region21: #{tpu_custom_call.1} parent=1 // pred_fallthru
      _
    // Predicated region
    $region22: #{tpu_custom_call.1} parent=1 // pred_check
      _
    $region23: #{tpu_custom_call.1} parent=1 // pred_check_branch
      %182 = sbr.rel (0) target = $region25
    $region24: #{tpu_custom_call.1} parent=1 // pred_region
      %184 = dma.done [#allocation3], 128
    $region25: #{tpu_custom_call.1} parent=1 // pred_fallthru
      _
    %185 = vsyncpa [#allocation3], 1

</llo_original>
